<compile_context>
chip_gen: v6e
topology: v6e:2x2x1
jax: 0.10.0
libtpu: 0.0.40
codegen_flags: <defaults>
</compile_context>

<pallas_src>
import functools

import jax
import jax.numpy as jnp
from jax.experimental import pallas as pl
from jax.experimental.pallas import tpu as pltpu

_LANE = 128          # TPU lane width: class dim padded to a multiple of this
_KMAX = 512          # K (input_size) tile cap, multiple of 128
_TB_MAX = 1024       # batch tile cap


def _round_up(n, m):
    return ((n + m - 1) // m) * m


# ----------------------------- kernel ----------------------------------------


def _epilogue(logits_nobias, b_ref, y_ref, probs_ref, rowloss_ref,
              *, num_classes, want_probs, want_loss):
    """Softmax over the (lane-padded) class axis + optional per-row CE loss."""
    logits = logits_nobias + b_ref[...]
    col = jax.lax.broadcasted_iota(jnp.int32, logits.shape, dimension=1)
    valid = col < num_classes                       # mask zero-padded class columns

    masked = jnp.where(valid, logits, -jnp.inf)
    m = jnp.max(masked, axis=1, keepdims=True)
    e = jnp.exp(masked - m)                         # padded cols -> exactly 0
    denom = jnp.sum(e, axis=1, keepdims=True)
    probs = e / denom                               # exact: rows sum to 1 to f32 ulps

    if want_probs:
        probs_ref[...] = probs.astype(probs_ref.dtype)

    if want_loss:
        # torch CrossEntropyLoss applied to `probs` as if they were logits
        # (reproduces the reference's softmax-then-CE double softmax):
        #   loss_i = logsumexp_j(probs_ij) - probs_i[y_i]
        # probs are in [0,1] so exp cannot overflow -> no max-shift needed.
        lse = jnp.log(jnp.sum(jnp.where(valid, jnp.exp(probs), 0.0),
                              axis=1, keepdims=True))
        picked = jnp.sum(jnp.where(col == y_ref[...], probs, 0.0),
                         axis=1, keepdims=True)
        rowloss_ref[...] = lse - picked


def _fused_kernel(*refs, num_classes, want_probs, want_loss, single_k):
    it = iter(refs)
    x_ref = next(it)
    w_ref = next(it)
    b_ref = next(it)
    y_ref = next(it) if want_loss else None
    probs_ref = next(it) if want_probs else None
    rowloss_ref = next(it) if want_loss else None
    acc_ref = None if single_k else next(it)

    # MXU matmul with f32 accumulation (inputs may be f32 or bf16).
    part = jnp.dot(x_ref[...], w_ref[...], preferred_element_type=jnp.float32)

    if single_k:
        _epilogue(part, b_ref, y_ref, probs_ref, rowloss_ref,
                  num_classes=num_classes,
                  want_probs=want_probs, want_loss=want_loss)
    else:
        k = pl.program_id(1)

        @pl.when(k == 0)
        def _():
            acc_ref[...] = jnp.zeros_like(acc_ref)

        acc_ref[...] += part

        @pl.when(k == pl.num_programs(1) - 1)
        def _():
            _epilogue(acc_ref[...], b_ref, y_ref, probs_ref, rowloss_ref,
                      num_classes=num_classes,
                      want_probs=want_probs, want_loss=want_loss)


# ----------------------------- wrappers ----------------------------------------


def prepare_params(w, b, matmul_dtype=None):
    """One-time parameter prep (NOT per call): pad W/b to lane-dense shapes.

    w: (D, C) torch weight already transposed to (input, classes); b: (C,).
    Returns (wp (Dp, Cp) in matmul dtype, bp (1, Cp) f32).
    """
    D, C = w.shape
    if matmul_dtype is None:
        matmul_dtype = jnp.bfloat16 if D >= 256 else jnp.float32
    Cp = _round_up(C, _LANE)
    Dp = D if D <= _KMAX else _round_up(D, _KMAX)
    wp = jnp.zeros((Dp, Cp), matmul_dtype).at[:D, :C].set(w.astype(matmul_dtype))
    bp = jnp.zeros((1, Cp), jnp.float32).at[:, :C].set(
        b.reshape(1, -1).astype(jnp.float32))
    return wp, bp


def _vmem_capacity_bytes():
    try:
        return int(pltpu.get_tpu_info().vmem_capacity_bytes)
    except Exception:
        return 64 * 1024 * 1024  # v7x per-TC capacity: safe lower bound


def _fused_call(x, wp, bp, y, *, num_classes, want_probs, want_loss):
    """Single pallas_call producing any subset of {probs, per-row CE loss}."""
    B, D = x.shape
    Dp, Cp = wp.shape
    TK = Dp if Dp <= _KMAX else _KMAX
    nk = Dp // TK
    in_bytes = jnp.dtype(wp.dtype).itemsize
    align = 16 if wp.dtype == jnp.bfloat16 else 8   # sublane packing for bf16

    vmem_cap = _vmem_capacity_bytes()
    budget = int(vmem_cap * 0.6)

    # Batch tile: multiple of `align`, capped; >= 2 tiles for B >= 16 so the
    # "parallel" batch axis can shard across both v7x TensorCores; shrink until
    # the double-buffered working set fits the VMEM budget.
    TB = min(_TB_MAX, _round_up(B, align))
    if B >= 16:
        TB = min(TB, _round_up((B + 1) // 2, align))

    def vmem_need(tb):
        return (2 * tb * TK * in_bytes            # x tile (double-buffered)
                + 2 * TK * Cp * in_bytes          # W tile (double-buffered)
                + (2 * tb * Cp * 4 if want_probs else 0)   # probs out
                + (0 if nk == 1 else tb * Cp * 4))         # f32 accumulator

    while TB > align and vmem_need(TB) > budget:
        TB = max(align, _round_up(TB // 2, align))

    Bp = _round_up(B, TB)
    nb = Bp // TB

    # Per-call input prep (params were padded once in prepare_params).
    xp = x.astype(wp.dtype)
    if Dp != D:
        xp = jnp.pad(xp, ((0, 0), (0, Dp - D)))
    if Bp != B:
        xp = jnp.pad(xp, ((0, Bp - B), (0, 0)))

    args = [xp, wp, bp]
    in_specs = [
        pl.BlockSpec((TB, TK), lambda i, k: (i, k)),   # x tile
        pl.BlockSpec((TK, Cp), lambda i, k: (k, 0)),   # W K-tile
        pl.BlockSpec((1, Cp), lambda i, k: (0, 0)),    # bias (resident)
    ]
    if want_loss:
        yp = y.astype(jnp.int32)
        if Bp != B:
            yp = jnp.pad(yp, (0, Bp - B))
        args.append(yp.reshape(Bp, 1))
        in_specs.append(pl.BlockSpec((TB, 1), lambda i, k: (i, 0)))  # int labels

    out_shape, out_specs = [], []
    if want_probs:
        out_shape.append(jax.ShapeDtypeStruct((Bp, Cp), jnp.float32))
        out_specs.append(pl.BlockSpec((TB, Cp), lambda i, k: (i, 0)))  # lane-dense
    if want_loss:
        out_shape.append(jax.ShapeDtypeStruct((Bp, 1), jnp.float32))
        out_specs.append(pl.BlockSpec((TB, 1), lambda i, k: (i, 0)))

    scratch = [] if nk == 1 else [pltpu.VMEM((TB, Cp), jnp.float32)]

    kernel = functools.partial(
        _fused_kernel, num_classes=num_classes,
        want_probs=want_probs, want_loss=want_loss, single_k=(nk == 1))

    outs = pl.pallas_call(
        kernel,
        out_shape=tuple(out_shape),
        grid=(nb, nk),
        in_specs=in_specs,
        out_specs=tuple(out_specs),
        scratch_shapes=scratch,
        compiler_params=pltpu.CompilerParams(
            # batch tiles megacore-shard; K axis is a reduction (accumulator)
            dimension_semantics=("parallel", "arbitrary"),
            vmem_limit_bytes=max(32 * 1024 * 1024,
                                 min(int(vmem_cap * 0.9), 128 * 1024 * 1024)),
        ),
    )(*args)

    results = []
    idx = 0
    if want_probs:
        results.append(outs[idx][:B, :num_classes])
        idx += 1
    if want_loss:
        results.append(jnp.mean(outs[idx][:B, 0]))   # CE reduction='mean'
        idx += 1
    return tuple(results)


@functools.partial(jax.jit, static_argnames=("num_classes",))
def model_forward(x, wp, bp, *, num_classes):
    """forward(x): softmax(x @ W + b, axis=1) - loss branch entirely skipped."""
    (probs,) = _fused_call(x, wp, bp, None, num_classes=num_classes,
                           want_probs=True, want_loss=False)
    return probs


@functools.partial(jax.jit, static_argnames=("num_classes",))
def model_loss(x, y, wp, bp, *, num_classes):
    """forward(x, y): CrossEntropyLoss(softmax(x @ W + b), y) - no probs writeback."""
    (loss,) = _fused_call(x, wp, bp, y, num_classes=num_classes,
                          want_probs=False, want_loss=True)
    return loss


@functools.partial(jax.jit, static_argnames=("num_classes",))
def model_forward_and_loss(x, y, wp, bp, *, num_classes):
    """Probabilities AND loss from a single pallas_call."""
    return _fused_call(x, wp, bp, y, num_classes=num_classes,
                       want_probs=True, want_loss=True)


# ----------------------------- main -------------------------------------------

if __name__ == "__main__":
    B = 8            # batch
    INPUT_SIZE = 32  # input_size
    NUM_CLASSES = 8  # num_classes

    key = jax.random.PRNGKey(0)
    kx, ky, kw, kb = jax.random.split(key, 4)

    # torch nn.Linear-style uniform init (weight stored transposed: (D, C))
    bound = 1.0 / jnp.sqrt(jnp.float32(INPUT_SIZE))
    w = jax.random.uniform(kw, (INPUT_SIZE, NUM_CLASSES), jnp.float32, -bound, bound)
    b = jax.random.uniform(kb, (NUM_CLASSES,), jnp.float32, -bound, bound)

    x = jax.random.normal(kx, (B, INPUT_SIZE), jnp.float32)
    y = jax.random.randint(ky, (B,), 0, NUM_CLASSES)

    # One-time parameter prep (lane-padded W / b).
    wp, bp = prepare_params(w, b)

    # training-style path: ONE pallas_call -> probabilities AND loss
    probs, loss = model_forward_and_loss(x, y, wp, bp, num_classes=NUM_CLASSES)
    jax.block_until_ready((probs, loss))

    # specialized paths: probs only (no CE branch), loss only (no probs store)
    probs_only = model_forward(x, wp, bp, num_classes=NUM_CLASSES)
    loss_only = model_loss(x, y, wp, bp, num_classes=NUM_CLASSES)
    jax.block_until_ready((probs_only, loss_only))

    # pure-JAX reference (reproduces torch's softmax-then-CrossEntropyLoss)
    logits_ref = x @ w + b
    probs_ref = jax.nn.softmax(logits_ref, axis=1)
    lse_ref = jax.scipy.special.logsumexp(probs_ref, axis=1)
    loss_ref = jnp.mean(lse_ref - probs_ref[jnp.arange(B), y])

    assert probs.shape == (B, NUM_CLASSES)
    assert jnp.allclose(jnp.sum(probs, axis=1), 1.0, atol=1e-5)
    assert jnp.allclose(probs, probs_ref, atol=1e-4)
    assert jnp.allclose(probs, probs_only, atol=1e-6)
    assert jnp.allclose(loss, loss_ref, atol=1e-4)
    assert jnp.allclose(loss, loss_only, atol=1e-6)
    assert bool(jnp.isfinite(loss))

    print("KERNEL_OK")
</pallas_src>

<mosaic_0001>
module attributes {stable_mosaic.version = 11 : i64} {
  func.func @_fused_kernel(%arg0: i32, %arg1: i32, %arg2: memref<8x32xf32, #tpu.memory_space<vmem>>, %arg3: memref<32x128xf32, #tpu.memory_space<vmem>>, %arg4: memref<1x128xf32, #tpu.memory_space<vmem>>, %arg5: memref<8x1xi32, #tpu.memory_space<vmem>>, %arg6: memref<8x128xf32, #tpu.memory_space<vmem>>, %arg7: memref<8x1xf32, #tpu.memory_space<vmem>>) attributes {dimension_semantics = [#tpu.dimension_semantics<parallel>, #tpu.dimension_semantics<arbitrary>], iteration_bounds = array<i64: 1, 1>, scalar_prefetch = 0 : i64, scratch_operands = 0 : i64, tpu.core_type = #tpu.core_type<tc>, window_params = [{transform_indices = @transform_0, window_bounds = array<i64: 8, 32>}, {transform_indices = @transform_1, window_bounds = array<i64: 32, 128>}, {pipeline_mode = #tpu.pipeline_mode<synchronous>, transform_indices = @transform_2, window_bounds = array<i64: 1, 128>}, {transform_indices = @transform_3, window_bounds = array<i64: 8, 1>}, {transform_indices = @transform_4, window_bounds = array<i64: 8, 128>}, {transform_indices = @transform_5, window_bounds = array<i64: 8, 1>}]} {
    %c0 = arith.constant 0 : index
    %c0_0 = arith.constant 0 : index
    %0 = vector.load %arg2[%c0, %c0_0] : memref<8x32xf32, #tpu.memory_space<vmem>>, vector<8x32xf32>
    %c0_1 = arith.constant 0 : index
    %c0_2 = arith.constant 0 : index
    %1 = vector.load %arg3[%c0_1, %c0_2] : memref<32x128xf32, #tpu.memory_space<vmem>>, vector<32x128xf32>
    %cst = arith.constant dense<0.000000e+00> : vector<8x128xf32>
    %2 = tpu.matmul %0, %1, %cst {dimension_numbers = #tpu.dot_dimension_numbers<[1], [0], [0], [1], [0, 0, 1, 1], [], []>} : vector<8x32xf32>, vector<32x128xf32>, vector<8x128xf32> -> vector<8x128xf32>
    %c0_3 = arith.constant 0 : index
    %c0_4 = arith.constant 0 : index
    %3 = vector.load %arg4[%c0_3, %c0_4] : memref<1x128xf32, #tpu.memory_space<vmem>>, vector<1x128xf32>
    %4 = vector.broadcast %3 : vector<1x128xf32> to vector<8x128xf32>
    %5 = arith.addf %2, %4 : vector<8x128xf32>
    %6 = tpu.iota {dimensions = array<i32: 1>} : vector<8x128xi32>
    %c8_i32 = arith.constant 8 : i32
    %7 = vector.broadcast %c8_i32 : i32 to vector<8x128xi32>
    %8 = arith.cmpi slt, %6, %7 : vector<8x128xi32>
    %cst_5 = arith.constant 0xFF800000 : f32
    %9 = vector.broadcast %cst_5 : f32 to vector<8x128xf32>
    %10 = arith.select %8, %5, %9 : vector<8x128xi1>, vector<8x128xf32>
    %cst_6 = arith.constant dense<0xFF800000> : vector<8xf32>
    %11 = vector.multi_reduction <maximumf>, %10, %cst_6 [1] : vector<8x128xf32> to vector<8xf32>
    %12 = vector.shape_cast %11 : vector<8xf32> to vector<8x1xf32>
    %13 = vector.broadcast %12 : vector<8x1xf32> to vector<8x128xf32>
    %14 = arith.subf %10, %13 : vector<8x128xf32>
    %15 = math.exp %14 : vector<8x128xf32>
    %cst_7 = arith.constant dense<0.000000e+00> : vector<8xf32>
    %16 = vector.multi_reduction <add>, %15, %cst_7 [1] : vector<8x128xf32> to vector<8xf32>
    %17 = vector.shape_cast %16 : vector<8xf32> to vector<8x1xf32>
    %18 = vector.broadcast %17 : vector<8x1xf32> to vector<8x128xf32>
    %19 = arith.divf %15, %18 : vector<8x128xf32>
    %c0_8 = arith.constant 0 : index
    %c0_9 = arith.constant 0 : index
    %20 = vector.load %arg6[%c0_8, %c0_9] : memref<8x128xf32, #tpu.memory_space<vmem>>, vector<8x128xf32>
    tpu.vector_store %arg6[%c0_8, %c0_9], %19 {strides = array<i32>} : memref<8x128xf32, #tpu.memory_space<vmem>>, vector<8x128xf32>,
    %21 = math.exp %19 : vector<8x128xf32>
    %cst_10 = arith.constant 0.000000e+00 : f32
    %22 = vector.broadcast %cst_10 : f32 to vector<8x128xf32>
    %23 = arith.select %8, %21, %22 : vector<8x128xi1>, vector<8x128xf32>
    %cst_11 = arith.constant dense<0.000000e+00> : vector<8xf32>
    %24 = vector.multi_reduction <add>, %23, %cst_11 [1] : vector<8x128xf32> to vector<8xf32>
    %25 = vector.shape_cast %24 : vector<8xf32> to vector<8x1xf32>
    %26 = math.log %25 : vector<8x1xf32>
    %c0_12 = arith.constant 0 : index
    %c0_13 = arith.constant 0 : index
    %27 = vector.load %arg5[%c0_12, %c0_13] : memref<8x1xi32, #tpu.memory_space<vmem>>, vector<8x1xi32>
    %28 = vector.broadcast %27 : vector<8x1xi32> to vector<8x128xi32>
    %29 = arith.cmpi eq, %6, %28 : vector<8x128xi32>
    %cst_14 = arith.constant 0.000000e+00 : f32
    %30 = vector.broadcast %cst_14 : f32 to vector<8x128xf32>
    %31 = arith.select %29, %19, %30 : vector<8x128xi1>, vector<8x128xf32>
    %cst_15 = arith.constant dense<0.000000e+00> : vector<8xf32>
    %32 = vector.multi_reduction <add>, %31, %cst_15 [1] : vector<8x128xf32> to vector<8xf32>
    %33 = vector.shape_cast %32 : vector<8xf32> to vector<8x1xf32>
    %34 = arith.subf %26, %33 : vector<8x1xf32>
    %c0_16 = arith.constant 0 : index
    %c0_17 = arith.constant 0 : index
    %35 = vector.load %arg7[%c0_16, %c0_17] : memref<8x1xf32, #tpu.memory_space<vmem>>, vector<8x1xf32>
    tpu.vector_store %arg7[%c0_16, %c0_17], %34 {strides = array<i32>} : memref<8x1xf32, #tpu.memory_space<vmem>>, vector<8x1xf32>,
    return
  }
  func.func @transform_0(%arg0: i32, %arg1: i32) -> (i32, i32) {
    %c0_i32 = arith.constant 0 : i32
    return %arg0, %arg1 : i32, i32
  }
  func.func @transform_1(%arg0: i32, %arg1: i32) -> (i32, i32) {
    %c0_i32 = arith.constant 0 : i32
    %c0_i32_0 = arith.constant 0 : i32
    return %arg1, %c0_i32 : i32, i32
  }
  func.func @transform_2(%arg0: i32, %arg1: i32) -> (i32, i32) {
    %c0_i32 = arith.constant 0 : i32
    %c0_i32_0 = arith.constant 0 : i32
    %c0_i32_1 = arith.constant 0 : i32
    return %c0_i32, %c0_i32_0 : i32, i32
  }
  func.func @transform_3(%arg0: i32, %arg1: i32) -> (i32, i32) {
    %c0_i32 = arith.constant 0 : i32
    %c0_i32_0 = arith.constant 0 : i32
    return %arg0, %c0_i32 : i32, i32
  }
  func.func @transform_4(%arg0: i32, %arg1: i32) -> (i32, i32) {
    %c0_i32 = arith.constant 0 : i32
    %c0_i32_0 = arith.constant 0 : i32
    return %arg0, %c0_i32 : i32, i32
  }
  func.func @transform_5(%arg0: i32, %arg1: i32) -> (i32, i32) {
    %c0_i32 = arith.constant 0 : i32
    %c0_i32_0 = arith.constant 0 : i32
    return %arg0, %c0_i32 : i32, i32
  }
}

</mosaic_0001>

<llo_original>
// kernel: model_forward_and_loss.1
$region0: #{model_forward_and_loss.1}
  #allocation0 [shape = 'u32[]', space=smem, size = 0x4, offset = 0x4, fixed_abs, tag = 'smem constant byte address 0x4 - core index']
  #allocation1 [shape = 'u32[144,128]{1,0:T(1,128)}', space=vmem, size = 0x12000, scoped, tag = 'internal scratch']
  %s0 = inlined_call_operand.vmem [shape: f32[8,32], index: 0, kind: input, shape index: {}]
  %s1 = inlined_call_operand.hbm [shape: f32[32,128], index: 1, kind: input, shape index: {}]
  %s2 = inlined_call_operand.vmem [shape: f32[1,128], index: 2, kind: input, shape index: {}]
  %s3 = inlined_call_operand.vmem [shape: s32[8,1], index: 3, kind: input, shape index: {}]
  %s4 = inlined_call_operand.hbm [shape: f32[8,128], index: 4, kind: output, shape index: {0}]
  %s5 = inlined_call_operand.vmem [shape: f32[8,1], index: 5, kind: output, shape index: {1}]
  %6 = xla_tuple %s4, %s5
  %s7 = sld [smem:[#allocation0]]
  $region38: #{model_forward_and_loss.1} parent=0
    _
  %s9 = ssub.s32 1, %s7
  %s10 = scalar_select 0, %s9, %s7
  $region1: #{model_forward_and_loss.1} parent=0
    #allocation2 [shape = 'u8[16384]{0}', space=vmem, size = 0x4000, scoped, tag = 'input window, operand 1, single buffered']
    #allocation3 [shape = 's32[1]{0}', space=sflag, size = 0x4, scoped, tag = 'scoped memory for model_forward_and_loss.1']
    #allocation4 [shape = 's32[1]{0}', space=sflag, size = 0x4, scoped, tag = 'scoped memory for model_forward_and_loss.1']
    #allocation5 [shape = 'u8[4096]{0}', space=vmem, size = 0x1000, scoped, tag = 'output window, operand 0, single buffered']
    %11 = vsyncpa [#allocation3], 0
    %12 = vsyncpa [#allocation4], 0
    // Predicated region
    $region2: #{model_forward_and_loss.1} parent=1 // pred_check
      _
    $region3: #{model_forward_and_loss.1} parent=1 // pred_check_branch
      %14 = sbr.rel (0) target = $region5
    $region4: #{model_forward_and_loss.1} parent=1 // pred_region
      _
    $region5: #{model_forward_and_loss.1} parent=1 // pred_fallthru
      _
    // Predicated region
    $region6: #{model_forward_and_loss.1} parent=1 // pred_check
      _
    $region7: #{model_forward_and_loss.1} parent=1 // pred_check_branch
      %16 = sbr.rel (0) target = $region9
    $region8: #{model_forward_and_loss.1} parent=1 // pred_region
      %s18 = ssub.s32 512, 512
      %19 = vsyncadd [#allocation3], %s18
      %s20 = sshll.u32 [#allocation2], 4
      %s21 = int_to_ptr.vmem [resolvable:$true] %s20
      %26 = dma.hbm_to_vmem [thread:$0]  %s1, 512, %s21, [#allocation3], 128, 128, 8
    $region9: #{model_forward_and_loss.1} parent=1 // pred_fallthru
      _
    // Predicated region
    $region10: #{model_forward_and_loss.1} parent=1 // pred_check
      _
    $region11: #{model_forward_and_loss.1} parent=1 // pred_check_branch
      %28 = sbr.rel (0) target = $region13
    $region12: #{model_forward_and_loss.1} parent=1 // pred_region
      _
    $region13: #{model_forward_and_loss.1} parent=1 // pred_fallthru
      _
    // Predicated region
    $region14: #{model_forward_and_loss.1} parent=1 // pred_check
      _
    $region15: #{model_forward_and_loss.1} parent=1 // pred_check_branch
      %30 = sbr.rel (0) target = $region17
    $region16: #{model_forward_and_loss.1} parent=1 // pred_region
      _
    $region17: #{model_forward_and_loss.1} parent=1 // pred_fallthru
      _
    // Predicated region
    $region18: #{model_forward_and_loss.1} parent=1 // pred_check
      _
    $region19: #{model_forward_and_loss.1} parent=1 // pred_check_branch
      %32 = sbr.rel (0) target = $region21
    $region20: #{model_forward_and_loss.1} parent=1 // pred_region
      %33 = dma.done [#allocation3], 512
    $region21: #{model_forward_and_loss.1} parent=1 // pred_fallthru
      _
    %v34 = vld [vmem:[%s0] sm:$0xff]
    %v35 = vld [vmem:[#allocation2] sm:$0xff]
    %v36 = vld [vmem:[#allocation2 + $0x8] sm:$0xff]
    %v37 = vld [vmem:[#allocation2 + $0x10] sm:$0xff]
    %v38 = vld [vmem:[#allocation2 + $0x18] sm:$0xff]
    %v39 = vld [vmem:[%s2] sm:$0x1]
    %v41 = vlaneseq
    %v42 = vshrl.u32 %v41, 7
    %v43 = vsub.s32 0, %v42
    %v44 = vrot.slane %v39, %v43
    %vm46 = vcmask 261120
    %v48 = vsel %vm46, %v34, 0
    %50 = vmatprep.subr.mxu0 0.0
    %51 = vmatpush1.msra.mxu0 0.0
    %52 = vmatprep.subr.mxu0 0.0
    %53 = vmatpush1.msra.mxu0 0.0
    %54 = vmatprep.subr.mxu0 0.0
    %55 = vmatpush1.msra.mxu0 0.0
    %56 = vmatprep.subr.mxu0 0.0
    %57 = vmatpush1.msra.mxu0 0.0
    %58 = vmatprep.subr.mxu0 0.0
    %59 = vmatpush1.msra.mxu0 0.0
    %60 = vmatprep.subr.mxu0 0.0
    %61 = vmatpush1.msra.mxu0 0.0
    %62 = vmatprep.subr.mxu0 0.0
    %63 = vmatpush1.msra.mxu0 0.0
    %64 = vmatprep.subr.mxu0 0.0
    %65 = vmatpush1.msra.mxu0 0.0
    %66 = vmatprep.subr.mxu0 0.0
    %67 = vmatpush1.msra.mxu0 0.0
    %68 = vmatprep.subr.mxu0 0.0
    %69 = vmatpush1.msra.mxu0 0.0
    %70 = vmatprep.subr.mxu0 0.0
    %71 = vmatpush1.msra.mxu0 0.0
    %72 = vmatprep.subr.mxu0 0.0
    %73 = vmatpush1.msra.mxu0 0.0
    %74 = vmatprep.subr.mxu0 0.0
    %75 = vmatpush1.msra.mxu0 %v38
    %76 = vmatprep.subr.mxu0 0.0
    %77 = vmatpush1.msra.mxu0 %v37
    %78 = vmatprep.subr.mxu0 0.0
    %79 = vmatpush1.msra.mxu0 %v36
    %80 = vmatprep.subr.mxu0 0.0
    %81 = vmatpush1.msra.mxu0 %v35
    %82 = vmatprep.subr.mxu0 0.0
    %83 = vmatpush2.msra.mxu0 0.0
    %84 = vmatprep.subr.mxu0 0.0
    %85 = vmatpush2.msra.mxu0 0.0
    %86 = vmatprep.subr.mxu0 0.0
    %87 = vmatpush2.msra.mxu0 0.0
    %88 = vmatprep.subr.mxu0 0.0
    %89 = vmatpush2.msra.mxu0 0.0
    %90 = vmatprep.subr.mxu0 0.0
    %91 = vmatpush2.msra.mxu0 0.0
    %92 = vmatprep.subr.mxu0 0.0
    %93 = vmatpush2.msra.mxu0 0.0
    %94 = vmatprep.subr.mxu0 0.0
    %95 = vmatpush2.msra.mxu0 0.0
    %96 = vmatprep.subr.mxu0 0.0
    %97 = vmatpush2.msra.mxu0 0.0
    %98 = vmatprep.subr.mxu0 0.0
    %99 = vmatpush2.msra.mxu0 0.0
    %100 = vmatprep.subr.mxu0 0.0
    %101 = vmatpush2.msra.mxu0 0.0
    %102 = vmatprep.subr.mxu0 0.0
    %103 = vmatpush2.msra.mxu0 0.0
    %104 = vmatprep.subr.mxu0 0.0
    %105 = vmatpush2.msra.mxu0 0.0
    %106 = vmatprep.subr.mxu0 0.0
    %107 = vmatpush2.msra.mxu0 0.0
    %108 = vmatprep.subr.mxu0 0.0
    %109 = vmatpush2.msra.mxu0 0.0
    %110 = vmatprep.subr.mxu0 0.0
    %111 = vmatpush2.msra.mxu0 0.0
    %112 = vmatprep.subr.mxu0 0.0
    %113 = vmatpush2.msra.mxu0 0.0
    %114 = vmatprep.mubr.f32.mxu0 0.0
    %115 = vmatmul.mubr.f32.gmra.mxu0 %v48
    %v116 = vpop.f32.mrf.mxu0
    %v117 = vadd.f32 %v44, %v116
    %v118 = vpop.f32.mrf.mxu0
    %119 = vdwg.mxu0
    %v120 = vlaneseq
    %v121 = vand.u32 %v120, 127
    %vm122 = vcmp.lt.s32.totalorder %v121, 8
    %v123 = vsel %vm122, %v117, -inf
    %124 = vmax.xlane.f32.xlu0 %v123
    %v125 = vpop.xlane.xlu0 %124
    %v126 = vsub.f32 %v123, %v125
    %v127 = vmul.f32 %v126, 1.442695
    %v128 = vpow.pop %v127
    %129 = vadd.xlane.f32.xlu0 %v128
    %v130 = vpop.xlane.xlu0 %129
    %v131 = vrcp.pop %v130
    %v132 = vmul.f32 %v128, %v131
    %133 = vst [vmem:[#allocation5] sm:$0xff] %v132
    %v134 = vmul.f32 %v132, 1.442695
    %v135 = vpow.pop %v134
    %v136 = vsel %vm122, %v135, 0.0
    %137 = vadd.xlane.f32.xlu0 %v136
    %v138 = vpop.xlane.xlu0 %137
    %v139 = vlog2.pop %v138
    %v140 = vmul.f32 %v139, 0.6931472
    %v141 = vld [vmem:[%s3] sm:$0xff]
    %142 = vset.pattern.permute.xlu0 0
    %143 = vperm.xlu0 %142, %v141
    %v144 = vpop.permute.xlu0 %143
    %vm145 = vcmp.eq.s32.totalorder %v121, %v144
    %v146 = vsel %vm145, %v132, 0.0
    %147 = vadd.xlane.f32.xlu0 %v146
    %v148 = vpop.xlane.xlu0 %147
    %v149 = vsub.f32 %v140, %v148
    %vm150 = vcmask 7168
    %151 = vst.msk [vmem:[%s5] sm:$0xff] %vm150, %v149
    // Predicated region
    $region22: #{model_forward_and_loss.1} parent=1 // pred_check
      _
    $region23: #{model_forward_and_loss.1} parent=1 // pred_check_branch
      %153 = sbr.rel (0) target = $region25
    $region24: #{model_forward_and_loss.1} parent=1 // pred_region
      %s155 = ssub.s32 128, 128
      %156 = vsyncadd [#allocation4], %s155
      %s158 = sshll.u32 [#allocation5], 4
      %s159 = int_to_ptr.vmem [resolvable:$true] %s158
      %161 = dma.vmem_to_hbm [thread:$0]  %s159, 128, %s4, [#allocation4]
    $region25: #{model_forward_and_loss.1} parent=1 // pred_fallthru
      _
    // Predicated region
    $region26: #{model_forward_and_loss.1} parent=1 // pred_check
      _
    $region27: #{model_forward_and_loss.1} parent=1 // pred_check_branch
      %163 = sbr.rel (0) target = $region29
    $region28: #{model_forward_and_loss.1} parent=1 // pred_region
      _
    $region29: #{model_forward_and_loss.1} parent=1 // pred_fallthru
      _
    // Predicated region
    $region30: #{model_forward_and_loss.1} parent=1 // pred_check
      _
    $region31: #{model_forward_and_loss.1} parent=1 // pred_check_branch
      %165 = sbr.rel (0) target = $region33
    $region32: #{model_forward_and_loss.1} parent=1 // pred_region
      %166 = dma.done [#allocation4], 128
    $region33: #{model_forward_and_loss.1} parent=1 // pred_fallthru
      _
    // Predicated region
    $region34: #{model_forward_and_loss.1} parent=1 // pred_check
      _
    $region35: #{model_forward_and_loss.1} parent=1 // pred_check_branch
      %168 = sbr.rel (0) target = $region37
    $region36: #{model_forward_and_loss.1} parent=1 // pred_region
      _
    $region37: #{model_forward_and_loss.1} parent=1 // pred_fallthru
      _
    %169 = vsyncpa [#allocation3], 1
    %170 = vsyncpa [#allocation4], 1

</llo_original>
